<compile_context>
chip_gen: v7x
topology: tpu7x:2x2x1
jax: 0.10.0
libtpu: 0.0.40
codegen_flags: <defaults>
</compile_context>

<pallas_src>
import numpy as np
import jax
import jax.numpy as jnp
from jax.experimental import pallas as pl
from jax.experimental.pallas import tpu as pltpu


def causal_bow_kernel(att_ref, x_ref, y_ref):
    """att_ref: (tq, T) f32, x_ref: (T, tn) f32, y_ref: (tq, tn) f32.

    Pure DMA + MXU work: all VPU-side att construction was hoisted to the
    wrapper and is DMA'd once per resident block.
    """
    y_ref[...] = jnp.dot(
        att_ref[...], x_ref[...], preferred_element_type=jnp.float32
    ).astype(y_ref.dtype)


def _pick_tile(dim, preferred, align):
    """Largest multiple of `align` that divides `dim` and is <= preferred.

    Falls back to the full dimension (full-array blocks are always legal,
    regardless of (8, 128) alignment)."""
    if dim % align == 0 and dim > align:
        t = min(preferred, dim)
        t = max((t // align) * align, align)
        while dim % t != 0:
            t -= align
        return t
    return dim


def causal_bow_forward(x):
    """x: (B, T, C) float32. Returns y: (B, T, C) = causal prefix mean of x."""
    B, T, C = x.shape
    N = B * C

    # Uniform causal attention weights, built ONCE (outside the grid loop).
    # att[t, s] = 1/(t+1) if s <= t else 0  -- exactly softmax(masked zeros).
    row = jax.lax.broadcasted_iota(jnp.float32, (T, T), 0)
    col = jax.lax.broadcasted_iota(jnp.float32, (T, T), 1)
    att = jnp.where(col <= row, 1.0 / (row + 1.0), 0.0).astype(jnp.float32)

    # Fold batch into the lane dimension: one lane-dense matmul for all B.
    xp = jnp.transpose(x, (1, 0, 2)).reshape(T, N)

    # Tile the query (sublane) and packed-lane dims only when large & aligned.
    tq = _pick_tile(T, preferred=256, align=8)
    tn = _pick_tile(N, preferred=512, align=128)
    grid = (T // tq, N // tn)

    itemsize = jnp.dtype(jnp.float32).itemsize
    cost = pl.CostEstimate(
        flops=2 * T * T * N,
        transcendentals=0,
        bytes_accessed=(T * T + 2 * T * N) * itemsize,
    )
    # Explicit VMEM budget (double-buffered in/out tiles + headroom); keeps
    # the kernel within v7x's tighter 64 MiB physical VMEM at larger tiles.
    tile_bytes = itemsize * (tq * T + T * tn + tq * tn)
    vmem_limit = int(min(max(4 * tile_bytes + (1 << 20), 4 << 20), 64 << 20))

    yp = pl.pallas_call(
        causal_bow_kernel,
        out_shape=jax.ShapeDtypeStruct((T, N), jnp.float32),
        grid_spec=pltpu.PrefetchScalarGridSpec(
            num_scalar_prefetch=0,
            grid=grid,
            in_specs=[
                # att block depends only on the query-tile index -> stays
                # VMEM-resident across the lane-tile axis.
                pl.BlockSpec((tq, T), lambda i, j: (i, 0)),
                # packed x block depends only on the lane-tile index.
                pl.BlockSpec((T, tn), lambda i, j: (0, j)),
            ],
            out_specs=pl.BlockSpec((tq, tn), lambda i, j: (i, j)),
        ),
        compiler_params=pltpu.CompilerParams(
            dimension_semantics=("parallel", "parallel"),
            vmem_limit_bytes=vmem_limit,
        ),
        cost_estimate=cost,
    )(att, xp)

    # Unpack the lane dimension back to (B, T, C).
    return jnp.transpose(yp.reshape(T, B, C), (1, 0, 2)).astype(x.dtype)


def _reference(x):
    """Pure-JAX reference matching the PyTorch module."""
    B, T, C = x.shape
    mask = jnp.tril(jnp.ones((T, T), dtype=jnp.float32))
    att = jnp.where(mask == 0, -jnp.inf, 0.0)
    att = jax.nn.softmax(att, axis=-1)
    return jnp.einsum("ts,bsc->btc", att, x)


if __name__ == "__main__":
    key = jax.random.PRNGKey(0)

    # Small shapes consistent with the module: block_size = 8, n_embd = 32.
    B, T, C = 2, 8, 32
    x = jax.random.normal(key, (B, T, C), dtype=jnp.float32)

    y = causal_bow_forward(x)
    jax.block_until_ready(y)

    y_ref = _reference(x)
    if not np.allclose(np.asarray(y), np.asarray(y_ref), atol=1e-5, rtol=1e-5):
        raise AssertionError("CausalBoW output mismatch vs reference")

    print("KERNEL_OK")
</pallas_src>

<mosaic_0001>
module attributes {stable_mosaic.version = 11 : i64} {
  func.func @causal_bow_kernel(%arg0: i32, %arg1: i32, %arg2: memref<8x8xf32, #tpu.memory_space<vmem>>, %arg3: memref<8x64xf32, #tpu.memory_space<vmem>>, %arg4: memref<8x64xf32, #tpu.memory_space<vmem>>) attributes {dimension_semantics = [#tpu.dimension_semantics<parallel>, #tpu.dimension_semantics<parallel>], iteration_bounds = array<i64: 1, 1>, scalar_prefetch = 0 : i64, scratch_operands = 0 : i64, tpu.core_type = #tpu.core_type<tc>, window_params = [{transform_indices = @transform_0, window_bounds = array<i64: 8, 8>}, {transform_indices = @transform_1, window_bounds = array<i64: 8, 64>}, {transform_indices = @transform_2, window_bounds = array<i64: 8, 64>}]} {
    %c0 = arith.constant 0 : index
    %c0_0 = arith.constant 0 : index
    %0 = vector.load %arg2[%c0, %c0_0] : memref<8x8xf32, #tpu.memory_space<vmem>>, vector<8x8xf32>
    %c0_1 = arith.constant 0 : index
    %c0_2 = arith.constant 0 : index
    %1 = vector.load %arg3[%c0_1, %c0_2] : memref<8x64xf32, #tpu.memory_space<vmem>>, vector<8x64xf32>
    %cst = arith.constant dense<0.000000e+00> : vector<8x64xf32>
    %2 = tpu.matmul %0, %1, %cst {dimension_numbers = #tpu.dot_dimension_numbers<[1], [0], [0], [1], [0, 0, 1, 1], [], []>} : vector<8x8xf32>, vector<8x64xf32>, vector<8x64xf32> -> vector<8x64xf32>
    %c0_3 = arith.constant 0 : index
    %c0_4 = arith.constant 0 : index
    %3 = vector.load %arg4[%c0_3, %c0_4] : memref<8x64xf32, #tpu.memory_space<vmem>>, vector<8x64xf32>
    tpu.vector_store %arg4[%c0_3, %c0_4], %2 {strides = array<i32>} : memref<8x64xf32, #tpu.memory_space<vmem>>, vector<8x64xf32>,
    return
  }
  func.func @transform_0(%arg0: i32, %arg1: i32) -> (i32, i32) {
    %c0_i32 = arith.constant 0 : i32
    %c0_i32_0 = arith.constant 0 : i32
    return %arg0, %c0_i32 : i32, i32
  }
  func.func @transform_1(%arg0: i32, %arg1: i32) -> (i32, i32) {
    %c0_i32 = arith.constant 0 : i32
    %c0_i32_0 = arith.constant 0 : i32
    return %c0_i32, %arg1 : i32, i32
  }
  func.func @transform_2(%arg0: i32, %arg1: i32) -> (i32, i32) {
    %c0_i32 = arith.constant 0 : i32
    return %arg0, %arg1 : i32, i32
  }
}

</mosaic_0001>

<llo_original>
// kernel: tpu_custom_call.1
$region0: #{tpu_custom_call.1}
  #allocation0 [shape = 'u32[]', space=smem, size = 0x4, offset = 0x4, fixed_abs, tag = 'smem constant byte address 0x4 - core index']
  #allocation1 [shape = 'u32[144,128]{1,0:T(1,128)}', space=vmem, size = 0x12000, scoped, tag = 'internal scratch']
  %s0 = inlined_call_operand.hbm [shape: f32[8,8], index: 0, kind: input, shape index: {}]
  %s1 = inlined_call_operand.hbm [shape: f32[8,64], index: 1, kind: input, shape index: {}]
  %s2 = inlined_call_operand.hbm [shape: f32[8,64], index: 2, kind: output, shape index: {}]
  %s3 = sld [smem:[#allocation0]]
  $region26: #{tpu_custom_call.1} parent=0
    _
  %s5 = ssub.s32 1, %s3
  %s6 = scalar_select 0, %s5, %s3
  $region1: #{tpu_custom_call.1} parent=0
    #allocation2 [shape = 'u8[4096]{0}', space=vmem, size = 0x1000, scoped, tag = 'input window, operand 0, single buffered']
    #allocation3 [shape = 's32[1]{0}', space=sflag, size = 0x4, scoped, tag = 'scoped memory for tpu_custom_call.1']
    #allocation4 [shape = 's32[1]{0}', space=sflag, size = 0x4, scoped, tag = 'scoped memory for tpu_custom_call.1']
    #allocation5 [shape = 'u8[4096]{0}', space=vmem, size = 0x1000, scoped, tag = 'input window, operand 1, single buffered']
    #allocation6 [shape = 's32[1]{0}', space=sflag, size = 0x4, scoped, tag = 'scoped memory for tpu_custom_call.1']
    #allocation7 [shape = 'u8[4096]{0}', space=vmem, size = 0x1000, scoped, tag = 'output window, operand 0, single buffered']
    %7 = vsyncpa [#allocation3], 0
    %8 = vsyncpa [#allocation6], 0
    %9 = vsyncpa [#allocation4], 0
    // Predicated region
    $region2: #{tpu_custom_call.1} parent=1 // pred_check
      _
    $region3: #{tpu_custom_call.1} parent=1 // pred_check_branch
      %11 = sbr.rel (0) target = $region5
    $region4: #{tpu_custom_call.1} parent=1 // pred_region
      %s13 = ssub.s32 128, 128
      %14 = vsyncadd [#allocation3], %s13
      %s16 = sshll.u32 [#allocation2], 4
      %s17 = int_to_ptr.vmem [resolvable:$true] %s16
      %19 = dma.hbm_to_vmem [thread:$0]  %s0, 128, %s17, [#allocation3]
    $region5: #{tpu_custom_call.1} parent=1 // pred_fallthru
      _
    // Predicated region
    $region6: #{tpu_custom_call.1} parent=1 // pred_check
      _
    $region7: #{tpu_custom_call.1} parent=1 // pred_check_branch
      %21 = sbr.rel (0) target = $region9
    $region8: #{tpu_custom_call.1} parent=1 // pred_region
      %s23 = ssub.s32 128, 128
      %24 = vsyncadd [#allocation6], %s23
      %s26 = sshll.u32 [#allocation5], 4
      %s27 = int_to_ptr.vmem [resolvable:$true] %s26
      %29 = dma.hbm_to_vmem [thread:$0]  %s1, 128, %s27, [#allocation6]
    $region9: #{tpu_custom_call.1} parent=1 // pred_fallthru
      _
    // Predicated region
    $region10: #{tpu_custom_call.1} parent=1 // pred_check
      _
    $region11: #{tpu_custom_call.1} parent=1 // pred_check_branch
      %31 = sbr.rel (0) target = $region13
    $region12: #{tpu_custom_call.1} parent=1 // pred_region
      %32 = dma.done [#allocation3], 128
    $region13: #{tpu_custom_call.1} parent=1 // pred_fallthru
      _
    // Predicated region
    $region14: #{tpu_custom_call.1} parent=1 // pred_check
      _
    $region15: #{tpu_custom_call.1} parent=1 // pred_check_branch
      %34 = sbr.rel (0) target = $region17
    $region16: #{tpu_custom_call.1} parent=1 // pred_region
      %35 = dma.done [#allocation6], 128
    $region17: #{tpu_custom_call.1} parent=1 // pred_fallthru
      _
    %v36 = vld [vmem:[#allocation2] sm:$0xff]
    %v37 = vld [vmem:[#allocation5] sm:$0xff]
    %vm38 = vcmask 64512
    %v40 = vsel %vm38, %v36, 0
    %42 = vmatprep.subr.mxu0 0.0
    %43 = vmatpush1.msra.mxu0 %v37
    %44 = vmatprep.subr.mxu0 0.0
    %45 = vmatpush1.msra.mxu0 0.0
    %46 = vmatprep.subr.mxu0 0.0
    %47 = vmatpush1.msra.mxu0 0.0
    %48 = vmatprep.subr.mxu0 0.0
    %49 = vmatpush1.msra.mxu0 0.0
    %50 = vmatprep.subr.mxu0 0.0
    %51 = vmatpush1.msra.mxu0 0.0
    %52 = vmatprep.subr.mxu0 0.0
    %53 = vmatpush1.msra.mxu0 0.0
    %54 = vmatprep.subr.mxu0 0.0
    %55 = vmatpush1.msra.mxu0 0.0
    %56 = vmatprep.subr.mxu0 0.0
    %57 = vmatpush1.msra.mxu0 0.0
    %58 = vmatprep.subr.mxu0 0.0
    %59 = vmatpush1.msra.mxu0 0.0
    %60 = vmatprep.subr.mxu0 0.0
    %61 = vmatpush1.msra.mxu0 0.0
    %62 = vmatprep.subr.mxu0 0.0
    %63 = vmatpush1.msra.mxu0 0.0
    %64 = vmatprep.subr.mxu0 0.0
    %65 = vmatpush1.msra.mxu0 0.0
    %66 = vmatprep.subr.mxu0 0.0
    %67 = vmatpush1.msra.mxu0 0.0
    %68 = vmatprep.subr.mxu0 0.0
    %69 = vmatpush1.msra.mxu0 0.0
    %70 = vmatprep.subr.mxu0 0.0
    %71 = vmatpush1.msra.mxu0 0.0
    %72 = vmatprep.subr.mxu0 0.0
    %73 = vmatpush1.msra.mxu0 0.0
    %74 = vmatprep.subr.mxu0 0.0
    %75 = vmatpush1.msra.mxu0 0.0
    %76 = vmatprep.subr.mxu0 0.0
    %77 = vmatpush1.msra.mxu0 0.0
    %78 = vmatprep.subr.mxu0 0.0
    %79 = vmatpush1.msra.mxu0 0.0
    %80 = vmatprep.subr.mxu0 0.0
    %81 = vmatpush1.msra.mxu0 0.0
    %82 = vmatprep.subr.mxu0 0.0
    %83 = vmatpush1.msra.mxu0 0.0
    %84 = vmatprep.subr.mxu0 0.0
    %85 = vmatpush1.msra.mxu0 0.0
    %86 = vmatprep.subr.mxu0 0.0
    %87 = vmatpush1.msra.mxu0 0.0
    %88 = vmatprep.subr.mxu0 0.0
    %89 = vmatpush1.msra.mxu0 0.0
    %90 = vmatprep.subr.mxu0 0.0
    %91 = vmatpush1.msra.mxu0 0.0
    %92 = vmatprep.subr.mxu0 0.0
    %93 = vmatpush1.msra.mxu0 0.0
    %94 = vmatprep.subr.mxu0 0.0
    %95 = vmatpush1.msra.mxu0 0.0
    %96 = vmatprep.subr.mxu0 0.0
    %97 = vmatpush1.msra.mxu0 0.0
    %98 = vmatprep.subr.mxu0 0.0
    %99 = vmatpush1.msra.mxu0 0.0
    %100 = vmatprep.subr.mxu0 0.0
    %101 = vmatpush1.msra.mxu0 0.0
    %102 = vmatprep.subr.mxu0 0.0
    %103 = vmatpush1.msra.mxu0 0.0
    %104 = vmatprep.subr.mxu0 0.0
    %105 = vmatpush1.msra.mxu0 0.0
    %106 = vmatprep.mubr.f32.mxu0 0.0
    %107 = vmatmul.mubr.f32.gmra.mrb[0].mxu0 %v40
    %v108 = vpop.f32.mrb[0].mxu0
    %v109 = vadd.f32 0.0, %v108
    %v110 = vpop.f32.mrb[0].mxu0
    %111 = vdwg.mxu0
    %vm112 = vcmask 523264
    %113 = vst.msk [vmem:[#allocation7] sm:$0xff] %vm112, %v109
    // Predicated region
    $region18: #{tpu_custom_call.1} parent=1 // pred_check
      _
    $region19: #{tpu_custom_call.1} parent=1 // pred_check_branch
      %115 = sbr.rel (0) target = $region21
    $region20: #{tpu_custom_call.1} parent=1 // pred_region
      %s117 = ssub.s32 128, 128
      %118 = vsyncadd [#allocation4], %s117
      %s120 = sshll.u32 [#allocation7], 4
      %s121 = int_to_ptr.vmem [resolvable:$true] %s120
      %123 = dma.vmem_to_hbm [thread:$0]  %s121, 128, %s2, [#allocation4]
    $region21: #{tpu_custom_call.1} parent=1 // pred_fallthru
      _
    // Predicated region
    $region22: #{tpu_custom_call.1} parent=1 // pred_check
      _
    $region23: #{tpu_custom_call.1} parent=1 // pred_check_branch
      %125 = sbr.rel (0) target = $region25
    $region24: #{tpu_custom_call.1} parent=1 // pred_region
      %126 = dma.done [#allocation4], 128
    $region25: #{tpu_custom_call.1} parent=1 // pred_fallthru
      _
    %127 = vsyncpa [#allocation3], 1
    %128 = vsyncpa [#allocation6], 1
    %129 = vsyncpa [#allocation4], 1

</llo_original>
